<compile_context>
chip_gen: v7x
topology: tpu7x:2x2x1
jax: 0.10.0
libtpu: 0.0.40
codegen_flags: <defaults>
</compile_context>

<pallas_src>
import functools

import jax
import jax.numpy as jnp
from jax.experimental import pallas as pl
from jax.experimental.pallas import tpu as pltpu

C_SUB = 8            # class axis padded 5 -> 8, kept on the sublane axis
NEG_INF = -1e30      # padded-class bias (finite so 0 * NEG_INF stays finite)
EPS = 1e-10


def _round_up(a: int, b: int) -> int:
    return (a + b - 1) // b * b


def _cdiv(a: int, b: int) -> int:
    return (a + b - 1) // b


def semantic_decoder_kernel(x_ref, w_ref, b_ref, y_ref, probs_ref, stats_ref):
    # Layout: classes (padded to 8) on sublanes, hits on the 128-wide lane axis.
    x = x_ref[...].astype(jnp.bfloat16)           # [BR, F]   (cast in VMEM, not HBM)
    w = w_ref[...]                                # [C_SUB, F] bf16 (padded rows = 0)
    b = b_ref[...]                                # [C_SUB, 1] f32  (padded rows = -1e30)
    y = y_ref[...]                                # [1, BR]    int32 (-1 = ignore / pad)

    # ---- linear layer: logits[c, hit] = W @ x^T (MXU, bf16 ops, f32 accumulate) ----
    logits = jax.lax.dot_general(
        w, x, (((1,), (1,)), ((), ())),
        preferred_element_type=jnp.float32) + b   # [C_SUB, BR]

    # ---- one-hot targets / valid mask (tiny [8,1] iota, broadcast compare) ----
    cls = jax.lax.broadcasted_iota(jnp.int32, (C_SUB, 1), 0)     # [C_SUB, 1]
    yoh = (cls == y).astype(jnp.float32)                         # [C_SUB, BR]
    valid = y >= 0                                               # [1, BR] bool
    valid_f = jnp.where(valid, 1.0, 0.0)                         # [1, BR]

    # ---- softmax over the (sublane) class axis ----
    m = jnp.max(logits, axis=0, keepdims=True)                   # [1, BR]
    e = jnp.exp(logits - m)                                      # [C_SUB, BR]
    s = jnp.sum(e, axis=0, keepdims=True)                        # [1, BR]
    probs_ref[...] = (e * pl.reciprocal(s, approx=True)).astype(probs_ref.dtype)

    # ---- per-hit cross entropy (ignore_index=-1); where() (not *) so that any
    #      garbage tail columns (unpadded x boundary block) can't leak NaN/Inf ----
    lse = m + jnp.log(s)                                         # [1, BR]
    true_logit = jnp.sum(logits * yoh, axis=0, keepdims=True)    # [1, BR]
    ce = jnp.where(valid, lse - true_logit, 0.0)                 # [1, BR]
    # "prediction correct" == true class attains the row max (same as argmax
    # except on exact logit ties).
    correct = jnp.where(valid & (true_logit >= m), 1.0, 0.0)     # [1, BR]

    # ---- per-block per-class statistics, packed into one tiny output ----
    #   lane 0: true positives, lane 1: support, lane 2: sum of CE
    stats_ref[0, :, 0:1] = jnp.sum(yoh * correct, axis=1, keepdims=True)
    stats_ref[0, :, 1:2] = jnp.sum(yoh * valid_f, axis=1, keepdims=True)
    stats_ref[0, :, 2:3] = jnp.sum(yoh * ce, axis=1, keepdims=True)


@functools.partial(jax.jit, static_argnames=("block_rows",))
def semantic_decoder_forward(x, y, weight, bias, temp, *, block_rows=8192):
    """Returns (probs [N,C] softmax of the linear layer, loss scalar)."""
    n, f = x.shape
    c = weight.shape[0]
    assert c <= C_SUB

    # Hits per block: multiple of 128 lanes, capped at block_rows, and no
    # bigger than ~half the problem so the "parallel" grid has >= 2 blocks
    # whenever n allows (v7x: 2 TensorCores per chip).  At 8192 hits the live
    # VMEM state is only a few MiB — well inside the 32 MiB scoped limit.
    br = max(128, min(block_rows, _round_up(_cdiv(n, 2), 128)))
    g = _cdiv(n, br)
    n_pad = g * br

    # x is consumed as-is (no HBM pad/cast pass).  Only y (tiny) is padded so
    # any tail columns of the boundary block carry ignore_index = -1.
    y_row = jnp.full((1, n_pad), -1, jnp.int32).at[0, :n].set(y.astype(jnp.int32))
    w_pad = jnp.zeros((C_SUB, f), jnp.bfloat16).at[:c].set(weight.astype(jnp.bfloat16))
    b_pad = jnp.full((C_SUB, 1), NEG_INF, jnp.float32).at[:c, 0].set(
        bias.astype(jnp.float32))

    probs_p, stats_p = pl.pallas_call(
        semantic_decoder_kernel,
        grid=(g,),
        in_specs=[
            pl.BlockSpec((br, f), lambda i: (i, 0)),          # x block   [BR, F]
            pl.BlockSpec((C_SUB, f), lambda i: (0, 0)),       # W_pad (resident)
            pl.BlockSpec((C_SUB, 1), lambda i: (0, 0)),       # bias  (resident)
            pl.BlockSpec((1, br), lambda i: (0, i)),          # y row block
        ],
        out_specs=(
            pl.BlockSpec((C_SUB, br), lambda i: (0, i)),      # probs [C_SUB, BR]
            pl.BlockSpec((1, C_SUB, 3), lambda i: (i, 0, 0)),  # packed stats
        ),
        out_shape=(
            jax.ShapeDtypeStruct((C_SUB, n_pad), jnp.bfloat16),
            jax.ShapeDtypeStruct((g, C_SUB, 3), jnp.float32),
        ),
        compiler_params=pltpu.CompilerParams(
            dimension_semantics=("parallel",),
            vmem_limit_bytes=32 * 1024 * 1024,
        ),
    )(x, w_pad, b_pad, y_row)

    # ---- phase 2: recall-weighted loss from the tiny per-block statistics ----
    stats = jnp.sum(stats_p, axis=0)                 # [C_SUB, 3]
    tp, support, ce_sum = stats[:, 0], stats[:, 1], stats[:, 2]
    recall = tp / (support + EPS)
    n_valid = jnp.sum(support)                       # each valid hit hits one class
    recall_loss = jnp.sum((1.0 - recall) * ce_sum) / jnp.maximum(n_valid, 1.0)
    temp = jnp.asarray(temp, jnp.float32)
    loss = 2.0 * jnp.exp(-temp) * recall_loss + temp

    probs = probs_p[:c, :n].astype(jnp.float32).T    # [N, C]
    return probs, loss


def _reference(x, y, weight, bias, temp):
    """Plain-JAX reference (bf16-rounded MXU operands to match the kernel path)."""
    c = weight.shape[0]
    xb = x.astype(jnp.bfloat16).astype(jnp.float32)
    wb = weight.astype(jnp.bfloat16).astype(jnp.float32)
    logits = xb @ wb.T + bias
    probs = jax.nn.softmax(logits, axis=1)
    valid = (y >= 0).astype(jnp.float32)
    yoh = jax.nn.one_hot(y, c, dtype=jnp.float32)
    lse = jax.scipy.special.logsumexp(logits, axis=1)
    ce = (lse - jnp.sum(logits * yoh, axis=1)) * valid
    pred = jnp.argmax(logits, axis=1)
    pred_oh = jax.nn.one_hot(pred, c, dtype=jnp.float32)
    tp = jnp.sum(pred_oh * yoh * valid[:, None], axis=0)
    support = jnp.sum(yoh * valid[:, None], axis=0)
    recall = tp / (support + EPS)
    w_hit = jnp.sum(yoh * (1.0 - recall)[None, :], axis=1)
    recall_loss = jnp.sum(w_hit * ce) / jnp.maximum(jnp.sum(valid), 1.0)
    loss = 2.0 * jnp.exp(-temp) * recall_loss + temp
    return probs, loss


if __name__ == "__main__":
    key = jax.random.PRNGKey(0)
    hit_features = 32
    semantic_classes = ["MIP", "HIP", "shower", "michel", "diffuse"]
    num_classes = len(semantic_classes)
    n_hits = 256   # two 128-hit blocks -> exercises the multi-block parallel grid

    k1, k2, k3, k4 = jax.random.split(key, 4)
    x = jax.random.normal(k1, (n_hits, hit_features), jnp.float32)
    # y_semantic labels in [-1, num_classes); -1 = ignore_index
    y = jax.random.randint(k2, (n_hits,), -1, num_classes)
    # nn.Linear default init: U(-1/sqrt(in), 1/sqrt(in))
    bound = 1.0 / (hit_features ** 0.5)
    weight = jax.random.uniform(k3, (num_classes, hit_features), jnp.float32,
                                -bound, bound)
    bias = jax.random.uniform(k4, (num_classes,), jnp.float32, -bound, bound)
    temp = jnp.float32(0.0)   # nn.Parameter(torch.tensor(0.0))

    probs, loss = semantic_decoder_forward(x, y, weight, bias, temp)
    jax.block_until_ready((probs, loss))

    probs_r, loss_r = _reference(x, y, weight, bias, temp)
    assert probs.shape == (n_hits, num_classes)
    assert jnp.allclose(probs, probs_r, atol=8e-3, rtol=2e-2), \
        float(jnp.max(jnp.abs(probs - probs_r)))
    assert jnp.allclose(loss, loss_r, atol=2e-3, rtol=2e-3), \
        (float(loss), float(loss_r))

    print("KERNEL_OK")
</pallas_src>

<mosaic_0001>
module attributes {stable_mosaic.version = 11 : i64} {
  func.func @semantic_decoder_kernel(%arg0: i32, %arg1: memref<128x32xf32, #tpu.memory_space<vmem>>, %arg2: memref<8x32xbf16, #tpu.memory_space<vmem>>, %arg3: memref<8x1xf32, #tpu.memory_space<vmem>>, %arg4: memref<1x128xi32, #tpu.memory_space<vmem>>, %arg5: memref<8x128xbf16, #tpu.memory_space<vmem>>, %arg6: memref<1x8x3xf32, #tpu.memory_space<vmem>>) attributes {dimension_semantics = [#tpu.dimension_semantics<parallel>], iteration_bounds = array<i64: 2>, scalar_prefetch = 0 : i64, scratch_operands = 0 : i64, tpu.core_type = #tpu.core_type<tc>, window_params = [{transform_indices = @transform_0, window_bounds = array<i64: 128, 32>}, {pipeline_mode = #tpu.pipeline_mode<synchronous>, transform_indices = @transform_1, window_bounds = array<i64: 8, 32>}, {pipeline_mode = #tpu.pipeline_mode<synchronous>, transform_indices = @transform_2, window_bounds = array<i64: 8, 1>}, {transform_indices = @transform_3, window_bounds = array<i64: 1, 128>}, {transform_indices = @transform_4, window_bounds = array<i64: 8, 128>}, {transform_indices = @transform_5, window_bounds = array<i64: 1, 8, 3>}]} {
    %c0 = arith.constant 0 : index
    %c0_0 = arith.constant 0 : index
    %0 = vector.load %arg1[%c0, %c0_0] : memref<128x32xf32, #tpu.memory_space<vmem>>, vector<128x32xf32>
    %1 = arith.truncf %0 : vector<128x32xf32> to vector<128x32xbf16>
    %c0_1 = arith.constant 0 : index
    %c0_2 = arith.constant 0 : index
    %2 = vector.load %arg2[%c0_1, %c0_2] : memref<8x32xbf16, #tpu.memory_space<vmem>>, vector<8x32xbf16>
    %c0_3 = arith.constant 0 : index
    %c0_4 = arith.constant 0 : index
    %3 = vector.load %arg3[%c0_3, %c0_4] : memref<8x1xf32, #tpu.memory_space<vmem>>, vector<8x1xf32>
    %c0_5 = arith.constant 0 : index
    %c0_6 = arith.constant 0 : index
    %4 = vector.load %arg4[%c0_5, %c0_6] : memref<1x128xi32, #tpu.memory_space<vmem>>, vector<1x128xi32>
    %cst = arith.constant dense<0.000000e+00> : vector<8x128xf32>
    %5 = tpu.matmul %2, %1, %cst {dimension_numbers = #tpu.dot_dimension_numbers<[1], [1], [0], [0], [0, 0, 1, 0], [], []>} : vector<8x32xbf16>, vector<128x32xbf16>, vector<8x128xf32> -> vector<8x128xf32>
    %6 = vector.broadcast %3 : vector<8x1xf32> to vector<8x128xf32>
    %7 = arith.addf %5, %6 : vector<8x128xf32>
    %8 = tpu.iota {dimensions = array<i32: 0>} : vector<8x1xi32>
    %9 = vector.broadcast %8 : vector<8x1xi32> to vector<8x128xi32>
    %10 = vector.broadcast %4 : vector<1x128xi32> to vector<8x128xi32>
    %11 = arith.cmpi eq, %9, %10 : vector<8x128xi32>
    %12 = arith.extui %11 : vector<8x128xi1> to vector<8x128xi32>
    %13 = arith.sitofp %12 : vector<8x128xi32> to vector<8x128xf32>
    %c0_i32 = arith.constant 0 : i32
    %14 = vector.broadcast %c0_i32 : i32 to vector<1x128xi32>
    %15 = arith.cmpi sge, %4, %14 : vector<1x128xi32>
    %cst_7 = arith.constant 1.000000e+00 : f32
    %cst_8 = arith.constant 0.000000e+00 : f32
    %16 = vector.broadcast %cst_7 : f32 to vector<1x128xf32>
    %17 = vector.broadcast %cst_8 : f32 to vector<1x128xf32>
    %18 = arith.select %15, %16, %17 : vector<1x128xi1>, vector<1x128xf32>
    %cst_9 = arith.constant dense<0xFF800000> : vector<128xf32>
    %19 = vector.multi_reduction <maximumf>, %7, %cst_9 [0] : vector<8x128xf32> to vector<128xf32>
    %20 = vector.shape_cast %19 : vector<128xf32> to vector<1x128xf32>
    %21 = vector.broadcast %20 : vector<1x128xf32> to vector<8x128xf32>
    %22 = arith.subf %7, %21 : vector<8x128xf32>
    %23 = math.exp %22 : vector<8x128xf32>
    %cst_10 = arith.constant dense<0.000000e+00> : vector<128xf32>
    %24 = vector.multi_reduction <add>, %23, %cst_10 [0] : vector<8x128xf32> to vector<128xf32>
    %25 = vector.shape_cast %24 : vector<128xf32> to vector<1x128xf32>
    %26 = tpu.reciprocal %25 {approx = true} : vector<1x128xf32> -> vector<1x128xf32>
    %27 = vector.broadcast %26 : vector<1x128xf32> to vector<8x128xf32>
    %28 = arith.mulf %23, %27 : vector<8x128xf32>
    %29 = arith.truncf %28 : vector<8x128xf32> to vector<8x128xbf16>
    %c0_11 = arith.constant 0 : index
    %c0_12 = arith.constant 0 : index
    %30 = vector.load %arg5[%c0_11, %c0_12] : memref<8x128xbf16, #tpu.memory_space<vmem>>, vector<8x128xbf16>
    tpu.vector_store %arg5[%c0_11, %c0_12], %29 {strides = array<i32>} : memref<8x128xbf16, #tpu.memory_space<vmem>>, vector<8x128xbf16>,
    %31 = math.log %25 : vector<1x128xf32>
    %32 = arith.addf %20, %31 : vector<1x128xf32>
    %33 = arith.mulf %7, %13 : vector<8x128xf32>
    %cst_13 = arith.constant dense<0.000000e+00> : vector<128xf32>
    %34 = vector.multi_reduction <add>, %33, %cst_13 [0] : vector<8x128xf32> to vector<128xf32>
    %35 = vector.shape_cast %34 : vector<128xf32> to vector<1x128xf32>
    %36 = arith.subf %32, %35 : vector<1x128xf32>
    %cst_14 = arith.constant 0.000000e+00 : f32
    %37 = vector.broadcast %cst_14 : f32 to vector<1x128xf32>
    %38 = arith.select %15, %36, %37 : vector<1x128xi1>, vector<1x128xf32>
    %39 = arith.cmpf oge, %35, %20 : vector<1x128xf32>
    %40 = arith.andi %15, %39 : vector<1x128xi1>
    %cst_15 = arith.constant 1.000000e+00 : f32
    %cst_16 = arith.constant 0.000000e+00 : f32
    %41 = vector.broadcast %cst_15 : f32 to vector<1x128xf32>
    %42 = vector.broadcast %cst_16 : f32 to vector<1x128xf32>
    %43 = arith.select %40, %41, %42 : vector<1x128xi1>, vector<1x128xf32>
    %44 = vector.broadcast %43 : vector<1x128xf32> to vector<8x128xf32>
    %45 = arith.mulf %13, %44 : vector<8x128xf32>
    %cst_17 = arith.constant dense<0.000000e+00> : vector<8xf32>
    %46 = vector.multi_reduction <add>, %45, %cst_17 [1] : vector<8x128xf32> to vector<8xf32>
    %47 = vector.shape_cast %46 : vector<8xf32> to vector<8x1xf32>
    %c0_18 = arith.constant 0 : index
    %c0_19 = arith.constant 0 : index
    %c0_20 = arith.constant 0 : index
    %48 = vector.load %arg6[%c0_18, %c0_19, %c0_20] : memref<1x8x3xf32, #tpu.memory_space<vmem>>, vector<1x8x1xf32>
    %49 = vector.shape_cast %48 : vector<1x8x1xf32> to vector<8x1xf32>
    %50 = vector.shape_cast %47 : vector<8x1xf32> to vector<1x8x1xf32>
    tpu.vector_store %arg6[%c0_18, %c0_19, %c0_20], %50 {strides = array<i32>} : memref<1x8x3xf32, #tpu.memory_space<vmem>>, vector<1x8x1xf32>,
    %51 = vector.broadcast %18 : vector<1x128xf32> to vector<8x128xf32>
    %52 = arith.mulf %13, %51 : vector<8x128xf32>
    %cst_21 = arith.constant dense<0.000000e+00> : vector<8xf32>
    %53 = vector.multi_reduction <add>, %52, %cst_21 [1] : vector<8x128xf32> to vector<8xf32>
    %54 = vector.shape_cast %53 : vector<8xf32> to vector<8x1xf32>
    %c0_22 = arith.constant 0 : index
    %c0_23 = arith.constant 0 : index
    %c1 = arith.constant 1 : index
    %55 = vector.load %arg6[%c0_22, %c0_23, %c1] : memref<1x8x3xf32, #tpu.memory_space<vmem>>, vector<1x8x1xf32>
    %56 = vector.shape_cast %55 : vector<1x8x1xf32> to vector<8x1xf32>
    %57 = vector.shape_cast %54 : vector<8x1xf32> to vector<1x8x1xf32>
    tpu.vector_store %arg6[%c0_22, %c0_23, %c1], %57 {strides = array<i32>} : memref<1x8x3xf32, #tpu.memory_space<vmem>>, vector<1x8x1xf32>,
    %58 = vector.broadcast %38 : vector<1x128xf32> to vector<8x128xf32>
    %59 = arith.mulf %13, %58 : vector<8x128xf32>
    %cst_24 = arith.constant dense<0.000000e+00> : vector<8xf32>
    %60 = vector.multi_reduction <add>, %59, %cst_24 [1] : vector<8x128xf32> to vector<8xf32>
    %61 = vector.shape_cast %60 : vector<8xf32> to vector<8x1xf32>
    %c0_25 = arith.constant 0 : index
    %c0_26 = arith.constant 0 : index
    %c2 = arith.constant 2 : index
    %62 = vector.load %arg6[%c0_25, %c0_26, %c2] : memref<1x8x3xf32, #tpu.memory_space<vmem>>, vector<1x8x1xf32>
    %63 = vector.shape_cast %62 : vector<1x8x1xf32> to vector<8x1xf32>
    %64 = vector.shape_cast %61 : vector<8x1xf32> to vector<1x8x1xf32>
    tpu.vector_store %arg6[%c0_25, %c0_26, %c2], %64 {strides = array<i32>} : memref<1x8x3xf32, #tpu.memory_space<vmem>>, vector<1x8x1xf32>,
    return
  }
  func.func @transform_0(%arg0: i32) -> (i32, i32) {
    %c0_i32 = arith.constant 0 : i32
    %c0_i32_0 = arith.constant 0 : i32
    return %arg0, %c0_i32 : i32, i32
  }
  func.func @transform_1(%arg0: i32) -> (i32, i32) {
    %c0_i32 = arith.constant 0 : i32
    %c0_i32_0 = arith.constant 0 : i32
    %c0_i32_1 = arith.constant 0 : i32
    return %c0_i32, %c0_i32_0 : i32, i32
  }
  func.func @transform_2(%arg0: i32) -> (i32, i32) {
    %c0_i32 = arith.constant 0 : i32
    %c0_i32_0 = arith.constant 0 : i32
    %c0_i32_1 = arith.constant 0 : i32
    return %c0_i32, %c0_i32_0 : i32, i32
  }
  func.func @transform_3(%arg0: i32) -> (i32, i32) {
    %c0_i32 = arith.constant 0 : i32
    %c0_i32_0 = arith.constant 0 : i32
    return %c0_i32, %arg0 : i32, i32
  }
  func.func @transform_4(%arg0: i32) -> (i32, i32) {
    %c0_i32 = arith.constant 0 : i32
    %c0_i32_0 = arith.constant 0 : i32
    return %c0_i32, %arg0 : i32, i32
  }
  func.func @transform_5(%arg0: i32) -> (i32, i32, i32) {
    %c0_i32 = arith.constant 0 : i32
    %c0_i32_0 = arith.constant 0 : i32
    %c0_i32_1 = arith.constant 0 : i32
    return %arg0, %c0_i32, %c0_i32_0 : i32, i32, i32
  }
}

</mosaic_0001>

<llo_original>
// kernel: semantic_decoder_forward.1
$region0: #{semantic_decoder_forward.1}
  #allocation0 [shape = 'u32[]', space=smem, size = 0x4, offset = 0x4, fixed_abs, tag = 'smem constant byte address 0x4 - core index']
  #allocation1 [shape = 'u32[144,128]{1,0:T(1,128)}', space=vmem, size = 0x12000, scoped, tag = 'internal scratch']
  %s0 = inlined_call_operand.vmem [shape: f32[256,32], index: 0, kind: input, shape index: {}]
  %s1 = inlined_call_operand.vmem [shape: bf16[8,32], index: 1, kind: input, shape index: {}]
  %s2 = inlined_call_operand.vmem [shape: f32[8,1], index: 2, kind: input, shape index: {}]
  %s3 = inlined_call_operand.vmem [shape: s32[1,256], index: 3, kind: input, shape index: {}]
  %s4 = inlined_call_operand.vmem [shape: bf16[8,256], index: 4, kind: output, shape index: {0}]
  %s5 = inlined_call_operand.vmem [shape: f32[2,8,3], index: 5, kind: output, shape index: {1}]
  %6 = xla_tuple %s4, %s5
  %s7 = sld [smem:[#allocation0]]
  $region57: #{semantic_decoder_forward.1} parent=0
    _
  %s9 = ssub.s32 1, %s7
  %s10 = scalar_select 0, %s9, %s7
  loop: start=0, step=1, limit=4
  $region2: #{semantic_decoder_forward.1} parent=0 // loop_pre_header
    _
  $region3: #{semantic_decoder_forward.1} parent=0 // loop_header
    %s12 = sphi 0, %s16
    %p13 = scmp.ge.s32.totalorder %s12, 4
    %s22 = sphi 0, %s24
    %s25 = sphi 0, %s22
    %s26 = sphi 0, %s25
    %s42 = sphi 0, %s26
    %s46 = sphi 0, %s46
    %s48 = sphi 0, %s46
    %s49 = sphi 0, %s48
    %s63 = sphi 0, %s49
    %s67 = sphi 0, %s67
    %s69 = sphi 0, %s67
    %s70 = sphi 0, %s69
    %s84 = sphi 0, %s70
    %s90 = sphi 0, %s92
    %s93 = sphi 0, %s90
    %s94 = sphi 0, %s93
    %s110 = sphi 0, %s94
    %s116 = sphi 0, %s118
    %s119 = sphi 0, %s116
    %s120 = sphi 0, %s119
    %s136 = sphi 0, %s120
    %s142 = sphi 0, %s144
    %s145 = sphi 0, %s142
    %s146 = sphi 0, %s145
    %s162 = sphi 0, %s146
  $region4: #{semantic_decoder_forward.1} parent=0 // loop_header_branch
    %15 = sbr.rel (%p13) target = $region8
  $region5: #{semantic_decoder_forward.1} parent=0 // loop_body
    %s17 = ssub.s32 %s12, 1
    %s18 = ssub.s32 %s12, 2
    %s19 = sadd.s32 %s12, 1
    %s20 = ssub.s32 %s12, %s19
    %p21 = scmp.eq.s32.totalorder %s20, 0
    %s23 = sadd.s32 %s22, 1
    %s24 = scalar_select %p21, %s22, %s23
    %p27 = pneg %p21
    %p28 = scmp.eq.s32.totalorder %s12, 1
    %p29 = por %p27, %p28
    %p30 = scmp.ne.s32.totalorder %s22, %s25
    %p31 = scmp.eq.s32.totalorder %s12, 0
    %p32 = por %p30, %p31
    %p33 = scmp.ne.s32.totalorder %s22, %s25
    %p34 = scmp.eq.s32.totalorder %s17, 1
    %p35 = por %p33, %p34
    %p36 = scmp.ne.s32.totalorder %s25, %s26
    %p37 = scmp.eq.s32.totalorder %s17, 0
    %p38 = por %p36, %p37
    %p39 = scmp.ne.s32.totalorder %s25, %s26
    %p40 = scmp.eq.s32.totalorder %s18, 1
    %p41 = por %p39, %p40
    %p43 = scmp.ne.s32.totalorder %s26, %s42
    %p44 = scmp.eq.s32.totalorder %s18, 0
    %p45 = por %p43, %p44
    %s47 = sadd.s32 %s46, 1
    %p50 = scmp.eq.s32.totalorder %s12, 1
    %p51 = scmp.ne.s32.totalorder %s46, %s48
    %p52 = scmp.eq.s32.totalorder %s12, 0
    %p53 = por %p51, %p52
    %p54 = scmp.ne.s32.totalorder %s46, %s48
    %p55 = scmp.eq.s32.totalorder %s17, 1
    %p56 = por %p54, %p55
    %p57 = scmp.ne.s32.totalorder %s48, %s49
    %p58 = scmp.eq.s32.totalorder %s17, 0
    %p59 = por %p57, %p58
    %p60 = scmp.ne.s32.totalorder %s48, %s49
    %p61 = scmp.eq.s32.totalorder %s18, 1
    %p62 = por %p60, %p61
    %p64 = scmp.ne.s32.totalorder %s49, %s63
    %p65 = scmp.eq.s32.totalorder %s18, 0
    %p66 = por %p64, %p65
    %s68 = sadd.s32 %s67, 1
    %p71 = scmp.eq.s32.totalorder %s12, 1
    %p72 = scmp.ne.s32.totalorder %s67, %s69
    %p73 = scmp.eq.s32.totalorder %s12, 0
    %p74 = por %p72, %p73
    %p75 = scmp.ne.s32.totalorder %s67, %s69
    %p76 = scmp.eq.s32.totalorder %s17, 1
    %p77 = por %p75, %p76
    %p78 = scmp.ne.s32.totalorder %s69, %s70
    %p79 = scmp.eq.s32.totalorder %s17, 0
    %p80 = por %p78, %p79
    %p81 = scmp.ne.s32.totalorder %s69, %s70
    %p82 = scmp.eq.s32.totalorder %s18, 1
    %p83 = por %p81, %p82
    %p85 = scmp.ne.s32.totalorder %s70, %s84
    %p86 = scmp.eq.s32.totalorder %s18, 0
    %p87 = por %p85, %p86
    %s88 = ssub.s32 %s12, %s19
    %p89 = scmp.eq.s32.totalorder %s88, 0
    %s91 = sadd.s32 %s90, 1
    %s92 = scalar_select %p89, %s90, %s91
    %p95 = pneg %p89
    %p96 = scmp.eq.s32.totalorder %s12, 1
    %p97 = por %p95, %p96
    %p98 = scmp.ne.s32.totalorder %s90, %s93
    %p99 = scmp.eq.s32.totalorder %s12, 0
    %p100 = por %p98, %p99
    %p101 = scmp.ne.s32.totalorder %s90, %s93
    %p102 = scmp.eq.s32.totalorder %s17, 1
    %p103 = por %p101, %p102
    %p104 = scmp.ne.s32.totalorder %s93, %s94
    %p105 = scmp.eq.s32.totalorder %s17, 0
    %p106 = por %p104, %p105
    %p107 = scmp.ne.s32.totalorder %s93, %s94
    %p108 = scmp.eq.s32.totalorder %s18, 1
    %p109 = por %p107, %p108
    %p111 = scmp.ne.s32.totalorder %s94, %s110
    %p112 = scmp.eq.s32.totalorder %s18, 0
    %p113 = por %p111, %p112
    %s114 = ssub.s32 %s12, %s19
    %p115 = scmp.eq.s32.totalorder %s114, 0
    %s117 = sadd.s32 %s116, 1
    %s118 = scalar_select %p115, %s116, %s117
    %p121 = pneg %p115
    %p122 = scmp.eq.s32.totalorder %s12, 1
    %p123 = por %p121, %p122
    %p124 = scmp.ne.s32.totalorder %s116, %s119
    %p125 = scmp.eq.s32.totalorder %s12, 0
    %p126 = por %p124, %p125
    %p127 = scmp.ne.s32.totalorder %s116, %s119
    %p128 = scmp.eq.s32.totalorder %s17, 1
    %p129 = por %p127, %p128
    %p130 = scmp.ne.s32.totalorder %s119, %s120
    %p131 = scmp.eq.s32.totalorder %s17, 0
    %p132 = por %p130, %p131
    %p133 = scmp.ne.s32.totalorder %s119, %s120
    %p134 = scmp.eq.s32.totalorder %s18, 1
    %p135 = por %p133, %p134
    %p137 = scmp.ne.s32.totalorder %s120, %s136
    %p138 = scmp.eq.s32.totalorder %s18, 0
    %p139 = por %p137, %p138
    %s140 = ssub.s32 %s12, %s19
    %p141 = scmp.eq.s32.totalorder %s140, 0
    %s143 = sadd.s32 %s142, 1
    %s144 = scalar_select %p141, %s142, %s143
    %p147 = pneg %p141
    %p148 = scmp.eq.s32.totalorder %s12, 1
    %p149 = por %p147, %p148
    %p150 = scmp.ne.s32.totalorder %s142, %s145
    %p151 = scmp.eq.s32.totalorder %s12, 0
    %p152 = por %p150, %p151
    %p153 = scmp.ne.s32.totalorder %s142, %s145
    %p154 = scmp.eq.s32.totalorder %s17, 1
    %p155 = por %p153, %p154
    %p156 = scmp.ne.s32.totalorder %s145, %s146
    %p157 = scmp.eq.s32.totalorder %s17, 0
    %p158 = por %p156, %p157
    %p159 = scmp.ne.s32.totalorder %s145, %s146
    %p160 = scmp.eq.s32.totalorder %s18, 1
    %p161 = por %p159, %p160
    %p163 = scmp.ne.s32.totalorder %s146, %s162
    %p164 = scmp.eq.s32.totalorder %s18, 0
    %p165 = por %p163, %p164
    %p166 = scmp.le.s32.totalorder 1, %s12
    %p167 = scmp.lt.s32.totalorder %s12, 3
    %p168 = pnand %p166, %p167
    %p169 = pneg %p168
    // Predicated region
    $region9: #{semantic_decoder_forward.1} parent=5 // pred_check
      _
    $region10: #{semantic_decoder_forward.1} parent=5 // pred_check_branch
      %171 = sbr.rel (%p168) target = $region12
    $region11: #{semantic_decoder_forward.1} parent=5 // pred_region
      %s172 = ssub.s32 %s12, 1
      // Predicated region
      $region13: #{semantic_decoder_forward.1} parent=11 // pred_check
        %p173 = pneg %p59
      $region14: #{semantic_decoder_forward.1} parent=11 // pred_check_branch
        %175 = sbr.rel (%p173) target = $region16
      $region15: #{semantic_decoder_forward.1} parent=11 // pred_region
        _
      $region16: #{semantic_decoder_forward.1} parent=11 // pred_fallthru
        _
      // Predicated region
      $region17: #{semantic_decoder_forward.1} parent=11 // pred_check
        %p176 = pneg %p80
      $region18: #{semantic_decoder_forward.1} parent=11 // pred_check_branch
        %178 = sbr.rel (%p176) target = $region20
      $region19: #{semantic_decoder_forward.1} parent=11 // pred_region
        _
      $region20: #{semantic_decoder_forward.1} parent=11 // pred_fallthru
        _
    $region12: #{semantic_decoder_forward.1} parent=5 // pred_fallthru
      _
    %p179 = scmp.lt.s32.totalorder %s12, 2
    // Predicated region
    $region21: #{semantic_decoder_forward.1} parent=5 // pred_check
      %p180 = pneg %p179
    $region22: #{semantic_decoder_forward.1} parent=5 // pred_check_branch
      %182 = sbr.rel (%p180) target = $region24
    $region23: #{semantic_decoder_forward.1} parent=5 // pred_region
      // Predicated region
      $region25: #{semantic_decoder_forward.1} parent=23 // pred_check
        %p183 = pneg %p32
      $region26: #{semantic_decoder_forward.1} parent=23 // pred_check_branch
        %185 = sbr.rel (%p183) target = $region28
      $region27: #{semantic_decoder_forward.1} parent=23 // pred_region
        %s186 = smul.u32 16, %s12
        %p187 = scmp.lt.s32.totalorder %s186, 31
        %s188 = scalar_select %p187, %s186, 31
        %s189 = smul.addr %s188, 8
        %s190 = scalar_lea.vmem %s0, %s189
        %s191 = smul.u32 16, %s12
      $region28: #{semantic_decoder_forward.1} parent=23 // pred_fallthru
        _
      // Predicated region
      $region29: #{semantic_decoder_forward.1} parent=23 // pred_check
        %p192 = pneg %p100
      $region30: #{semantic_decoder_forward.1} parent=23 // pred_check_branch
        %194 = sbr.rel (%p192) target = $region32
      $region31: #{semantic_decoder_forward.1} parent=23 // pred_region
        %p195 = scmp.lt.s32.totalorder %s12, 1
        %s196 = scalar_select %p195, %s12, 1
        %s197 = scalar_lea.vmem %s3, %s196
      $region32: #{semantic_decoder_forward.1} parent=23 // pred_fallthru
        _
    $region24: #{semantic_decoder_forward.1} parent=5 // pred_fallthru
      _
    %p198 = scmp.le.s32.totalorder 1, %s12
    %p199 = scmp.lt.s32.totalorder %s12, 3
    %p200 = pnand %p198, %p199
    %p201 = pneg %p200
    // Predicated region
    $region33: #{semantic_decoder_forward.1} parent=5 // pred_check
      _
    $region34: #{semantic_decoder_forward.1} parent=5 // pred_check_branch
      %203 = sbr.rel (%p200) target = $region36
    $region35: #{semantic_decoder_forward.1} parent=5 // pred_region
      %s204 = ssub.s32 %s12, 1
      %s205 = smul.u32 16, %s17
      %p206 = scmp.lt.s32.totalorder %s205, 31
      %s207 = scalar_select %p206, %s205, 31
      %s208 = smul.addr %s207, 8
      %s209 = scalar_lea.vmem %s0, %s208
      %p210 = pneg %p38
      %p211 = pneg %p35
      %p212 = pneg %p59
      %p213 = pneg %p56
      %p214 = pneg %p80
      %p215 = pneg %p77
      %p216 = scmp.lt.s32.totalorder %s17, 1
      %s217 = scalar_select %p216, %s17, 1
      %s218 = scalar_lea.vmem %s3, %s217
      %p219 = pneg %p106
      %p220 = pneg %p103
      %p221 = pneg %p132
      %p222 = pneg %p129
      %p223 = scmp.lt.s32.totalorder %s17, 1
      %s224 = scalar_select %p223, %s17, 1
      %s225 = smul.addr %s224, 4
      %s226 = scalar_lea.vmem %s4, %s225
      %p227 = pneg %p158
      %p228 = pneg %p155
      %p229 = scmp.lt.s32.totalorder %s17, 1
      %s230 = scalar_select %p229, %s17, 1
      %s231 = smul.addr %s230, 8
      %s232 = scalar_lea.vmem %s5, %s231
      %s233 = smul.u32 16, %s17
      %p234 = scmp.lt.s32.totalorder %s233, 31
      %s235 = scalar_select %p234, %s233, 31
      %s236 = smul.addr %s235, 8
      %s237 = scalar_lea.vmem %s0, %s236
      %s238 = smul.u32 16, %s17
      %p239 = scmp.lt.s32.totalorder %s17, 1
      %s240 = scalar_select %p239, %s17, 1
      %s241 = scalar_lea.vmem %s3, %s240
      %p242 = scmp.lt.s32.totalorder %s17, 1
      %s243 = scalar_select %p242, %s17, 1
      %s244 = smul.addr %s243, 4
      %s245 = scalar_lea.vmem %s4, %s244
      %p246 = scmp.lt.s32.totalorder %s17, 1
      %s247 = scalar_select %p246, %s17, 1
      %s248 = smul.addr %s247, 8
      %s249 = scalar_lea.vmem %s5, %s248
      %v251 = vld [vmem:[%s237] sm:$0xff]
      %v252 = vld [vmem:[%s237 + $0x8] sm:$0xff]
      %v253 = vld [vmem:[%s237 + $0x10] sm:$0xff]
      %v254 = vld [vmem:[%s237 + $0x18] sm:$0xff]
      %v255 = vld [vmem:[%s237 + $0x20] sm:$0xff]
      %v256 = vld [vmem:[%s237 + $0x28] sm:$0xff]
      %v257 = vld [vmem:[%s237 + $0x30] sm:$0xff]
      %v258 = vld [vmem:[%s237 + $0x38] sm:$0xff]
      %v259 = vld [vmem:[%s237 + $0x40] sm:$0xff]
      %v260 = vld [vmem:[%s237 + $0x48] sm:$0xff]
      %v261 = vld [vmem:[%s237 + $0x50] sm:$0xff]
      %v262 = vld [vmem:[%s237 + $0x58] sm:$0xff]
      %v263 = vld [vmem:[%s237 + $0x60] sm:$0xff]
      %v264 = vld [vmem:[%s237 + $0x68] sm:$0xff]
      %v265 = vld [vmem:[%s237 + $0x70] sm:$0xff]
      %v266 = vld [vmem:[%s237 + $0x78] sm:$0xff]
      %v267 = vpack.c.bf16 %v252, %v251
      %v268 = vpack.c.bf16 %v254, %v253
      %v269 = vpack.c.bf16 %v256, %v255
      %v270 = vpack.c.bf16 %v258, %v257
      %v271 = vpack.c.bf16 %v260, %v259
      %v272 = vpack.c.bf16 %v262, %v261
      %v273 = vpack.c.bf16 %v264, %v263
      %v274 = vpack.c.bf16 %v266, %v265
      %v275 = vld [vmem:[%s1] sm:$0xf]
      %v276 = vld [vmem:[%s2] sm:$0xff]
      %v277 = vld [vmem:[%s241] sm:$0x1]
      %279 = vset.pattern.permute.xlu0 0
      %280 = vperm.xlu0 %279, %v276
      %v281 = vpop.permute.xlu0 %280
      %vm283 = vcmask 261120
      %v285 = vsel %vm283, %v275, 0
      %v288 = vsel %vm283, %v267, 0
      %v291 = vsel %vm283, %v268, 0
      %v294 = vsel %vm283, %v269, 0
      %v297 = vsel %vm283, %v270, 0
      %v300 = vsel %vm283, %v271, 0
      %v303 = vsel %vm283, %v272, 0
      %v306 = vsel %vm283, %v273, 0
      %v309 = vsel %vm283, %v274, 0
      %311 = vmatprep.subr.bf16.mxu0 0
      %312 = vmatpush1.bf16.xpose.msra.mxu0 %v288
      %313 = vmatprep.subr.bf16.mxu0 0
      %314 = vmatpush1.bf16.xpose.msra.mxu0 %v291
      %315 = vmatprep.subr.bf16.mxu0 0
      %316 = vmatpush1.bf16.xpose.msra.mxu0 %v294
      %317 = vmatprep.subr.bf16.mxu0 0
      %318 = vmatpush1.bf16.xpose.msra.mxu0 %v297
      %319 = vmatprep.subr.bf16.mxu0 0
      %320 = vmatpush1.bf16.xpose.msra.mxu0 %v300
      %321 = vmatprep.subr.bf16.mxu0 0
      %322 = vmatpush1.bf16.xpose.msra.mxu0 %v303
      %323 = vmatprep.subr.bf16.mxu0 0
      %324 = vmatpush1.bf16.xpose.msra.mxu0 %v306
      %325 = vmatprep.subr.bf16.mxu0 0
      %326 = vmatpush1.bf16.xpose.msra.mxu0 %v309
      %327 = vmatprep.subr.bf16.mxu0 0
      %328 = vmatpush1.bf16.xpose.msra.mxu0 0
      %329 = vmatprep.subr.bf16.mxu0 0
      %330 = vmatpush1.bf16.xpose.msra.mxu0 0
      %331 = vmatprep.subr.bf16.mxu0 0
      %332 = vmatpush1.bf16.xpose.msra.mxu0 0
      %333 = vmatprep.subr.bf16.mxu0 0
      %334 = vmatpush1.bf16.xpose.msra.mxu0 0
      %335 = vmatprep.subr.bf16.mxu0 0
      %336 = vmatpush1.bf16.xpose.msra.mxu0 0
      %337 = vmatprep.subr.bf16.mxu0 0
      %338 = vmatpush1.bf16.xpose.msra.mxu0 0
      %339 = vmatprep.subr.bf16.mxu0 0
      %340 = vmatpush1.bf16.xpose.msra.mxu0 0
      %341 = vmatprep.subr.bf16.mxu0 0
      %342 = vmatpush1.bf16.xpose.msra.mxu0 0
      %343 = vmatprep.mubr.bf16.mxu0 0
      %344 = vmatmul.mubr.bf16.gmra.mrb[0].mxu0 %v285
      %v345 = vpop.f32.mrb[0].mxu0
      %v346 = vadd.f32 %v281, %v345
      %v347 = vpop.f32.mrb[0].mxu0
      %v348 = vpop.f32.mrb[0].mxu0
      %v349 = vpop.f32.mrb[0].mxu0
      %350 = vdwg.mxu0
      %v351 = vlaneseq
      %v352 = vshrl.u32 %v351, 7
      %v353 = vlaneseq
      %v354 = vshrl.u32 %v353, 7
      %v355 = vsub.s32 0, %v354
      %v356 = vrot.slane %v277, %v355
      %vm357 = vcmp.eq.s32.totalorder %v352, %v356
      %v358 = vsel %vm357, 1, 0
      %v359 = vcvt.s32.f32 %v358
      %vm360 = vcmp.ge.s32.totalorder %v277, 0
      %v361 = vsel %vm360, 1.0, 0.0
      %v362 = vrot.slane %v346, 4
      %v363 = vmax.f32 %v346, %v362
      %v364 = vrot.slane %v363, 2
      %v365 = vmax.f32 %v363, %v364
      %v366 = vrot.slane %v365, 1
      %v367 = vmax.f32 %v365, %v366
      %v368 = vsub.f32 %v346, %v367
      %v369 = vmul.f32 %v368, 1.442695
      %v370 = vpow.pop %v369
      %v371 = vrot.slane %v370, 4
      %v372 = vadd.f32 %v370, %v371
      %v373 = vrot.slane %v372, 2
      %v374 = vadd.f32 %v372, %v373
      %v375 = vrot.slane %v374, 1
      %v376 = vadd.f32 %v374, %v375
      %v377 = vrcp.pop %v376
      %v378 = vmul.f32 %v370, %v377
      %v379 = vpack.c.bf16 %v378, %v378
      %380 = vst [vmem:[%s245] sm:$0xf] %v379
      %v381 = vlog2.pop %v376
      %v382 = vmul.f32 %v381, 0.6931472
      %v383 = vadd.f32 %v367, %v382
      %v384 = vmul.f32 %v346, %v359
      %v385 = vrot.slane %v384, 4
      %v386 = vadd.f32 %v384, %v385
      %v387 = vrot.slane %v386, 2
      %v388 = vadd.f32 %v386, %v387
      %v389 = vrot.slane %v388, 1
      %v390 = vadd.f32 %v388, %v389
      %v391 = vsub.f32 %v383, %v390
      %v392 = vsel %vm360, %v391, 0.0
      %vm393 = vcmp.ge.f32.partialorder %v390, %v367
      %vm394 = vmand %vm360, %vm393
      %v395 = vsel %vm394, 1.0, 0.0
      %v397 = vlaneseq
      %v398 = vshrl.u32 %v397, 7
      %v399 = vsub.s32 0, %v398
      %v400 = vrot.slane %v395, %v399
      %v402 = vmul.f32 %v359, %v400
      %403 = vadd.xlane.f32.xlu0 %v402
      %v404 = vpop.xlane.xlu0 %403
      %vm405 = vcmask 7168
      %406 = vst.msk [vmem:[%s249] sm:$0xff] %vm405, %v404
      %v408 = vlaneseq
      %v409 = vshrl.u32 %v408, 7
      %v410 = vsub.s32 0, %v409
      %v411 = vrot.slane %v361, %v410
      %v413 = vmul.f32 %v359, %v411
      %414 = vadd.xlane.f32.xlu0 %v413
      %v415 = vpop.xlane.xlu0 %414
      %vm416 = vcmask 15368
      %417 = vst.msk [vmem:[%s249] sm:$0xff] %vm416, %v415
      %v419 = vlaneseq
      %v420 = vshrl.u32 %v419, 7
      %v421 = vsub.s32 0, %v420
      %v422 = vrot.slane %v392, %v421
      %v424 = vmul.f32 %v359, %v422
      %425 = vadd.xlane.f32.xlu0 %v424
      %v426 = vpop.xlane.xlu0 %425
      %vm427 = vcmask 23568
      %428 = vst.msk [vmem:[%s249] sm:$0xff] %vm427, %v426
      %p429 = scmp.lt.s32.totalorder %s17, 1
      %s430 = scalar_select %p429, %s17, 1
      %s431 = smul.addr %s430, 4
      %s432 = scalar_lea.vmem %s4, %s431
      %p433 = scmp.lt.s32.totalorder %s17, 1
      %s434 = scalar_select %p433, %s17, 1
      %s435 = smul.addr %s434, 8
      %s436 = scalar_lea.vmem %s5, %s435
      // Predicated region
      $region37: #{semantic_decoder_forward.1} parent=35 // pred_check
        %p437 = pneg %p129
      $region38: #{semantic_decoder_forward.1} parent=35 // pred_check_branch
        %439 = sbr.rel (%p437) target = $region40
      $region39: #{semantic_decoder_forward.1} parent=35 // pred_region
        _
      $region40: #{semantic_decoder_forward.1} parent=35 // pred_fallthru
        _
      // Predicated region
      $region41: #{semantic_decoder_forward.1} parent=35 // pred_check
        %p440 = pneg %p155
      $region42: #{semantic_decoder_forward.1} parent=35 // pred_check_branch
        %442 = sbr.rel (%p440) target = $region44
      $region43: #{semantic_decoder_forward.1} parent=35 // pred_region
        _
      $region44: #{semantic_decoder_forward.1} parent=35 // pred_fallthru
        _
    $region36: #{semantic_decoder_forward.1} parent=5 // pred_fallthru
      _
    %p443 = scmp.le.s32.totalorder 2, %s12
    // Predicated region
    $region45: #{semantic_decoder_forward.1} parent=5 // pred_check
      %p444 = pneg %p443
    $region46: #{semantic_decoder_forward.1} parent=5 // pred_check_branch
      %446 = sbr.rel (%p444) target = $region48
    $region47: #{semantic_decoder_forward.1} parent=5 // pred_region
      %s447 = ssub.s32 %s12, 2
      // Predicated region
      $region49: #{semantic_decoder_forward.1} parent=47 // pred_check
        %p448 = pneg %p135
      $region50: #{semantic_decoder_forward.1} parent=47 // pred_check_branch
        %450 = sbr.rel (%p448) target = $region52
      $region51: #{semantic_decoder_forward.1} parent=47 // pred_region
        %p451 = scmp.lt.s32.totalorder %s18, 1
        %s452 = scalar_select %p451, %s18, 1
        %s453 = smul.addr %s452, 4
        %s454 = scalar_lea.vmem %s4, %s453
      $region52: #{semantic_decoder_forward.1} parent=47 // pred_fallthru
        _
      // Predicated region
      $region53: #{semantic_decoder_forward.1} parent=47 // pred_check
        %p455 = pneg %p161
      $region54: #{semantic_decoder_forward.1} parent=47 // pred_check_branch
        %457 = sbr.rel (%p455) target = $region56
      $region55: #{semantic_decoder_forward.1} parent=47 // pred_region
        %p458 = scmp.lt.s32.totalorder %s18, 1
        %s459 = scalar_select %p458, %s18, 1
        %s460 = smul.addr %s459, 8
        %s461 = scalar_lea.vmem %s5, %s460
      $region56: #{semantic_decoder_forward.1} parent=47 // pred_fallthru
        _
    $region48: #{semantic_decoder_forward.1} parent=5 // pred_fallthru
      _
  $region6: #{semantic_decoder_forward.1} parent=0 // loop_footer
    %s16 = sadd.s32 1, %s12
  $region7: #{semantic_decoder_forward.1} parent=0 // loop_footer_branch
    %11 = sbr.rel target = $region3
  $region8: #{semantic_decoder_forward.1} parent=0 // loop_exit
    _

</llo_original>
